<compile_context>
chip_gen: v5e
topology: v5e:2x2
jax: 0.10.0
libtpu: 0.0.40
codegen_flags: <defaults>
</compile_context>

<pallas_src>
import functools

import jax
import jax.numpy as jnp
from jax import lax
from jax.experimental import pallas as pl
from jax.experimental.pallas import tpu as pltpu


def _learnable_matrix_kernel(x_ref, w_ref, b_ref, o_ref):
    # x_ref : (B, F_in)       full input, VMEM-resident across the whole grid
    # w_ref : (1, tn, F_in)   torch-layout (out, in) weight tile for this step
    # b_ref : (1, tn)         bias tile
    # o_ref : (B, tn)         lane-dense output tile of the (B, E*F_pad) slab
    x = x_ref[...]                       # (B, F_in)
    w = w_ref[0]                         # (tn, F_in)
    b = b_ref[...]                       # (1, tn)
    # y[b, n] = sum_f x[b, f] * w[n, f]  (contract the "in" dim of both)
    y = lax.dot_general(
        x, w,
        dimension_numbers=(((1,), (1,)), ((), ())),
        preferred_element_type=jnp.float32,
    )                                    # (B, tn) f32 accumulation
    o_ref[...] = (y + b.astype(jnp.float32)).astype(o_ref.dtype)


def _pick_tile_n(f_pad, f_in, w_itemsize):
    """Largest multiple-of-128 divisor of f_pad (<=1024) whose weight tile
    fits an ~8 MiB single-buffer budget (so 2x-buffered tiles fit v7x VMEM)."""
    budget = 8 * 1024 * 1024
    for cand in (1024, 896, 768, 640, 512, 384, 256, 128):
        if f_pad % cand == 0 and cand * f_in * w_itemsize <= budget:
            return cand
    return 128


@jax.jit
def learnable_matrix(x, weights, biases):
    """x: (B, F); weights: (E, F, F) torch-style (out, in); biases: (E, F).

    Returns (B, E, F), matching torch.cat([fc(x.unsqueeze(1)) ...], dim=1).
    """
    B, F_in = x.shape
    E, F_out, F_in_w = weights.shape
    assert F_in_w == F_in and F_out == F_in, "module uses square Linear layers"

    w_itemsize = jnp.dtype(weights.dtype).itemsize
    x_itemsize = jnp.dtype(x.dtype).itemsize

    # Pad the *output-feature* dim to a multiple of 128 for lane-dense stores.
    # TODO(synk): in a real model store parameters pre-padded at init so this
    # per-call pad (an extra pass over the weights) disappears.
    F_pad = ((F_out + 127) // 128) * 128
    if F_pad != F_out:
        weights = jnp.pad(weights, ((0, 0), (0, F_pad - F_out), (0, 0)))
        biases = jnp.pad(biases, ((0, 0), (0, F_pad - F_out)))

    tn = _pick_tile_n(F_pad, F_in, w_itemsize)
    nj = F_pad // tn                      # output tiles per embedding
    biases_flat = biases.reshape(1, E * F_pad)

    # Advisory cost estimate so XLA can overlap this mem-bound call.
    flops = 2 * B * E * F_out * F_in
    bytes_accessed = (E * F_pad * F_in * w_itemsize      # weight stream
                      + B * F_in * x_itemsize            # x
                      + E * F_pad * jnp.dtype(biases.dtype).itemsize
                      + B * E * F_pad * x_itemsize)      # output

    # VMEM budget: double-buffered blocks + headroom (tn is capped so this
    # stays well under v7x's 64 MiB physical VMEM).
    vmem_need = 2 * (B * F_in * x_itemsize
                     + tn * F_in * w_itemsize
                     + tn * jnp.dtype(biases.dtype).itemsize
                     + B * tn * x_itemsize)
    vmem_limit_bytes = max(int(1.5 * vmem_need) + (2 << 20), 32 << 20)

    out_flat = pl.pallas_call(
        _learnable_matrix_kernel,
        out_shape=jax.ShapeDtypeStruct((B, E * F_pad), x.dtype),
        grid_spec=pltpu.PrefetchScalarGridSpec(
            num_scalar_prefetch=0,
            grid=(E, nj),
            in_specs=[
                # x: same full block every step -> stays resident in VMEM.
                pl.BlockSpec((B, F_in), lambda e, j: (0, 0)),
                # W[e, j*tn:(j+1)*tn, :] in torch (out, in) layout — no wrapper transpose.
                pl.BlockSpec((1, tn, F_in), lambda e, j: (e, j, 0)),
                # bias tile from the flattened (1, E*F_pad) bias.
                pl.BlockSpec((1, tn), lambda e, j: (0, e * nj + j)),
            ],
            # Lane-dense output tile of the flat (B, E*F_pad) slab.
            out_specs=pl.BlockSpec((B, tn), lambda e, j: (0, e * nj + j)),
        ),
        compiler_params=pltpu.CompilerParams(
            dimension_semantics=("parallel", "parallel"),
            vmem_limit_bytes=vmem_limit_bytes,
        ),
        cost_estimate=pl.CostEstimate(
            flops=flops, transcendentals=0, bytes_accessed=bytes_accessed),
    )(x, weights, biases_flat)

    out = out_flat.reshape(B, E, F_pad)   # free reshape (row-major)
    if F_pad != F_out:
        out = out[:, :, :F_out]
    return out


if __name__ == "__main__":
    # Small shapes consistent with the module (in_features scaled down).
    batch = 8
    in_features = 256
    emb_dim = 4

    key = jax.random.PRNGKey(0)
    kx, kw, kb = jax.random.split(key, 3)

    x = jax.random.normal(kx, (batch, in_features), dtype=jnp.float32)
    bound = 1.0 / (in_features ** 0.5)
    weights = jax.random.uniform(
        kw, (emb_dim, in_features, in_features), jnp.float32, -bound, bound)
    biases = jax.random.uniform(
        kb, (emb_dim, in_features), jnp.float32, -bound, bound)

    # Pure-JAX reference (same math as the PyTorch forward).
    ref = jnp.stack(
        [x @ weights[e].T + biases[e] for e in range(emb_dim)], axis=1)

    # f32 path — tight tolerance.
    out = jax.block_until_ready(learnable_matrix(x, weights, biases))
    assert out.shape == (batch, emb_dim, in_features)
    assert jnp.allclose(out, ref, atol=1e-4, rtol=1e-4)

    # bf16 weight-streaming path (halves HBM bytes on the mem-bound weight
    # stream; f32 accumulation + f32 bias add inside the kernel).
    out_bf16 = jax.block_until_ready(
        learnable_matrix(x.astype(jnp.bfloat16),
                         weights.astype(jnp.bfloat16),
                         biases.astype(jnp.bfloat16)))
    assert out_bf16.shape == (batch, emb_dim, in_features)
    assert jnp.allclose(out_bf16.astype(jnp.float32), ref, atol=5e-2, rtol=5e-2)

    print("KERNEL_OK")
</pallas_src>

<mosaic_0001>
module attributes {stable_mosaic.version = 11 : i64} {
  func.func @_learnable_matrix_kernel(%arg0: i32, %arg1: i32, %arg2: memref<8x256xf32, #tpu.memory_space<vmem>>, %arg3: memref<1x256x256xf32, #tpu.memory_space<vmem>>, %arg4: memref<1x256xf32, #tpu.memory_space<vmem>>, %arg5: memref<8x256xf32, #tpu.memory_space<vmem>>) attributes {dimension_semantics = [#tpu.dimension_semantics<parallel>, #tpu.dimension_semantics<parallel>], iteration_bounds = array<i64: 4, 1>, scalar_prefetch = 0 : i64, scratch_operands = 0 : i64, tpu.core_type = #tpu.core_type<tc>, window_params = [{pipeline_mode = #tpu.pipeline_mode<synchronous>, transform_indices = @transform_0, window_bounds = array<i64: 8, 256>}, {transform_indices = @transform_1, window_bounds = array<i64: 1, 256, 256>}, {transform_indices = @transform_2, window_bounds = array<i64: 1, 256>}, {transform_indices = @transform_3, window_bounds = array<i64: 8, 256>}]} {
    %c0 = arith.constant 0 : index
    %c0_0 = arith.constant 0 : index
    %0 = vector.load %arg2[%c0, %c0_0] : memref<8x256xf32, #tpu.memory_space<vmem>>, vector<8x256xf32>
    %c0_1 = arith.constant 0 : index
    %c0_2 = arith.constant 0 : index
    %c0_3 = arith.constant 0 : index
    %1 = vector.load %arg3[%c0_1, %c0_2, %c0_3] : memref<1x256x256xf32, #tpu.memory_space<vmem>>, vector<1x256x256xf32>
    %2 = vector.shape_cast %1 : vector<1x256x256xf32> to vector<256x256xf32>
    %c0_4 = arith.constant 0 : index
    %c0_5 = arith.constant 0 : index
    %3 = vector.load %arg4[%c0_4, %c0_5] : memref<1x256xf32, #tpu.memory_space<vmem>>, vector<1x256xf32>
    %cst = arith.constant dense<0.000000e+00> : vector<8x256xf32>
    %4 = tpu.matmul %0, %2, %cst {dimension_numbers = #tpu.dot_dimension_numbers<[1], [1], [0], [0], [0, 0, 1, 0], [], []>} : vector<8x256xf32>, vector<256x256xf32>, vector<8x256xf32> -> vector<8x256xf32>
    %5 = vector.broadcast %3 : vector<1x256xf32> to vector<8x256xf32>
    %6 = arith.addf %4, %5 : vector<8x256xf32>
    %c0_6 = arith.constant 0 : index
    %c0_7 = arith.constant 0 : index
    %7 = vector.load %arg5[%c0_6, %c0_7] : memref<8x256xf32, #tpu.memory_space<vmem>>, vector<8x256xf32>
    tpu.vector_store %arg5[%c0_6, %c0_7], %6 {strides = array<i32>} : memref<8x256xf32, #tpu.memory_space<vmem>>, vector<8x256xf32>,
    return
  }
  func.func @transform_0(%arg0: i32, %arg1: i32) -> (i32, i32) {
    %c0_i32 = arith.constant 0 : i32
    %c0_i32_0 = arith.constant 0 : i32
    %c0_i32_1 = arith.constant 0 : i32
    return %c0_i32, %c0_i32_0 : i32, i32
  }
  func.func @transform_1(%arg0: i32, %arg1: i32) -> (i32, i32, i32) {
    %c0_i32 = arith.constant 0 : i32
    %c0_i32_0 = arith.constant 0 : i32
    return %arg0, %arg1, %c0_i32 : i32, i32, i32
  }
  func.func @transform_2(%arg0: i32, %arg1: i32) -> (i32, i32) {
    %c1_i32 = arith.constant 1 : i32
    %0 = arith.muli %arg0, %c1_i32 : i32
    %1 = arith.addi %0, %arg1 : i32
    %c0_i32 = arith.constant 0 : i32
    %c0_i32_0 = arith.constant 0 : i32
    return %c0_i32, %1 : i32, i32
  }
  func.func @transform_3(%arg0: i32, %arg1: i32) -> (i32, i32) {
    %c1_i32 = arith.constant 1 : i32
    %0 = arith.muli %arg0, %c1_i32 : i32
    %1 = arith.addi %0, %arg1 : i32
    %c0_i32 = arith.constant 0 : i32
    %c0_i32_0 = arith.constant 0 : i32
    return %c0_i32, %1 : i32, i32
  }
}

</mosaic_0001>

<llo_original>
// kernel: learnable_matrix.1
$region0: #{learnable_matrix.1}
  #allocation0 [shape = 'u32[]', space=smem, size = 0x4, offset = 0x4, fixed_abs, tag = 'smem constant byte address 0x4 - core index']
  #allocation1 [shape = 'u32[72,128]{1,0:T(1,128)}', space=vmem, size = 0x9000, scoped, tag = 'internal scratch']
  %s0 = inlined_call_operand.vmem [shape: f32[8,256], index: 0, kind: input, shape index: {}]
  %s1 = inlined_call_operand.hbm [shape: f32[4,256,256], index: 1, kind: input, shape index: {}]
  %s2 = inlined_call_operand.vmem [shape: f32[1,1024], index: 2, kind: input, shape index: {}]
  %s3 = inlined_call_operand.vmem [shape: f32[8,1024], index: 3, kind: output, shape index: {}]
  %s4 = sld [smem:[#allocation0]]
  $region49: #{learnable_matrix.1} parent=0
    _
  %s6 = ssub.s32 1, %s4
  %s7 = scalar_select 0, %s6, %s4
  $region1: #{learnable_matrix.1} parent=0
    #allocation2 [shape = 'u8[524288]{0}', space=vmem, size = 0x80000, scoped, tag = 'input window, operand 1']
    #allocation3 [shape = 's32[2]{0}', space=sflag, size = 0x8, scoped, tag = 'scoped memory for learnable_matrix.1']
    %8 = vsyncpa [#allocation3], 0
    %s9 = scalar_lea.sflag [#allocation3], 1
    %10 = vsyncpa %s9, 0
    loop: start=0, step=1, limit=6
    $region2: #{learnable_matrix.1} parent=1 // loop_pre_header
      _
    $region3: #{learnable_matrix.1} parent=1 // loop_header
      %s12 = sphi 0, %s16
      %p13 = scmp.ge.s32.totalorder %s12, 6
      %s19 = sphi 0, %s31
      %s20 = sphi 0, %s27
      %s21 = sphi 0, %s19
      %s22 = sphi 0, %s20
      %s23 = sphi 0, %s21
      %s24 = sphi 0, %s22
      %s32 = sphi 0, %s32
      %s34 = sphi 0, %s32
      %s35 = sphi 0, %s34
      %s49 = sphi 0, %s35
      %s57 = sphi 0, %s59
      %s60 = sphi 0, %s57
      %s61 = sphi 0, %s60
      %s77 = sphi 0, %s61
      %s85 = sphi 0, %s87
      %s88 = sphi 0, %s85
      %s89 = sphi 0, %s88
      %s105 = sphi 0, %s89
      %s113 = sphi 0, %s115
      %s116 = sphi 0, %s113
      %s117 = sphi 0, %s116
      %s133 = sphi 0, %s117
    $region4: #{learnable_matrix.1} parent=1 // loop_header_branch
      %15 = sbr.rel (%p13) target = $region8
    $region5: #{learnable_matrix.1} parent=1 // loop_body
      %s17 = ssub.s32 %s12, 1
      %s18 = ssub.s32 %s12, 2
      %s25 = sadd.s32 1, %s20
      %p26 = scmp.ge.s32.totalorder %s25, 1
      %s27 = scalar_select %p26, 0, %s25
      %s28 = sadd.s32 1, %s19
      %s29 = scalar_select %p26, %s28, %s19
      %p30 = scmp.ge.s32.totalorder %s29, 4
      %s31 = scalar_select %p30, 0, %s29
      %s33 = sadd.s32 %s32, 1
      %p36 = scmp.eq.s32.totalorder %s12, 3
      %p37 = scmp.ne.s32.totalorder %s32, %s34
      %p38 = scmp.eq.s32.totalorder %s12, 0
      %p39 = por %p37, %p38
      %p40 = scmp.ne.s32.totalorder %s32, %s34
      %p41 = scmp.eq.s32.totalorder %s17, 3
      %p42 = por %p40, %p41
      %p43 = scmp.ne.s32.totalorder %s34, %s35
      %p44 = scmp.eq.s32.totalorder %s17, 0
      %p45 = por %p43, %p44
      %p46 = scmp.ne.s32.totalorder %s34, %s35
      %p47 = scmp.eq.s32.totalorder %s18, 3
      %p48 = por %p46, %p47
      %p50 = scmp.ne.s32.totalorder %s35, %s49
      %p51 = scmp.eq.s32.totalorder %s18, 0
      %p52 = por %p50, %p51
      %s53 = ssub.s32 %s19, %s31
      %s54 = ssub.s32 %s20, %s27
      %s55 = sor.u32 %s53, %s54
      %p56 = scmp.eq.s32.totalorder %s55, 0
      %s58 = sadd.s32 %s57, 1
      %s59 = scalar_select %p56, %s57, %s58
      %p62 = pneg %p56
      %p63 = scmp.eq.s32.totalorder %s12, 3
      %p64 = por %p62, %p63
      %p65 = scmp.ne.s32.totalorder %s57, %s60
      %p66 = scmp.eq.s32.totalorder %s12, 0
      %p67 = por %p65, %p66
      %p68 = scmp.ne.s32.totalorder %s57, %s60
      %p69 = scmp.eq.s32.totalorder %s17, 3
      %p70 = por %p68, %p69
      %p71 = scmp.ne.s32.totalorder %s60, %s61
      %p72 = scmp.eq.s32.totalorder %s17, 0
      %p73 = por %p71, %p72
      %p74 = scmp.ne.s32.totalorder %s60, %s61
      %p75 = scmp.eq.s32.totalorder %s18, 3
      %p76 = por %p74, %p75
      %p78 = scmp.ne.s32.totalorder %s61, %s77
      %p79 = scmp.eq.s32.totalorder %s18, 0
      %p80 = por %p78, %p79
      %s81 = sadd.s32 %s19, %s20
      %s82 = sadd.s32 %s31, %s27
      %s83 = ssub.s32 %s81, %s82
      %p84 = scmp.eq.s32.totalorder %s83, 0
      %s86 = sadd.s32 %s85, 1
      %s87 = scalar_select %p84, %s85, %s86
      %p90 = pneg %p84
      %p91 = scmp.eq.s32.totalorder %s12, 3
      %p92 = por %p90, %p91
      %p93 = scmp.ne.s32.totalorder %s85, %s88
      %p94 = scmp.eq.s32.totalorder %s12, 0
      %p95 = por %p93, %p94
      %p96 = scmp.ne.s32.totalorder %s85, %s88
      %p97 = scmp.eq.s32.totalorder %s17, 3
      %p98 = por %p96, %p97
      %p99 = scmp.ne.s32.totalorder %s88, %s89
      %p100 = scmp.eq.s32.totalorder %s17, 0
      %p101 = por %p99, %p100
      %p102 = scmp.ne.s32.totalorder %s88, %s89
      %p103 = scmp.eq.s32.totalorder %s18, 3
      %p104 = por %p102, %p103
      %p106 = scmp.ne.s32.totalorder %s89, %s105
      %p107 = scmp.eq.s32.totalorder %s18, 0
      %p108 = por %p106, %p107
      %s109 = sadd.s32 %s19, %s20
      %s110 = sadd.s32 %s31, %s27
      %s111 = ssub.s32 %s109, %s110
      %p112 = scmp.eq.s32.totalorder %s111, 0
      %s114 = sadd.s32 %s113, 1
      %s115 = scalar_select %p112, %s113, %s114
      %p118 = pneg %p112
      %p119 = scmp.eq.s32.totalorder %s12, 3
      %p120 = por %p118, %p119
      %p121 = scmp.ne.s32.totalorder %s113, %s116
      %p122 = scmp.eq.s32.totalorder %s12, 0
      %p123 = por %p121, %p122
      %p124 = scmp.ne.s32.totalorder %s113, %s116
      %p125 = scmp.eq.s32.totalorder %s17, 3
      %p126 = por %p124, %p125
      %p127 = scmp.ne.s32.totalorder %s116, %s117
      %p128 = scmp.eq.s32.totalorder %s17, 0
      %p129 = por %p127, %p128
      %p130 = scmp.ne.s32.totalorder %s116, %s117
      %p131 = scmp.eq.s32.totalorder %s18, 3
      %p132 = por %p130, %p131
      %p134 = scmp.ne.s32.totalorder %s117, %s133
      %p135 = scmp.eq.s32.totalorder %s18, 0
      %p136 = por %p134, %p135
      %p137 = scmp.le.s32.totalorder 1, %s12
      %p138 = scmp.lt.s32.totalorder %s12, 5
      %p139 = pnand %p137, %p138
      %p140 = pneg %p139
      // Predicated region
      $region9: #{learnable_matrix.1} parent=5 // pred_check
        _
      $region10: #{learnable_matrix.1} parent=5 // pred_check_branch
        %142 = sbr.rel (%p139) target = $region12
      $region11: #{learnable_matrix.1} parent=5 // pred_region
        %s143 = ssub.s32 %s12, 1
        // Predicated region
        $region13: #{learnable_matrix.1} parent=11 // pred_check
          %p144 = pneg %p45
        $region14: #{learnable_matrix.1} parent=11 // pred_check_branch
          %146 = sbr.rel (%p144) target = $region16
        $region15: #{learnable_matrix.1} parent=11 // pred_region
          _
        $region16: #{learnable_matrix.1} parent=11 // pred_fallthru
          _
      $region12: #{learnable_matrix.1} parent=5 // pred_fallthru
        _
      %p147 = scmp.lt.s32.totalorder %s12, 4
      // Predicated region
      $region17: #{learnable_matrix.1} parent=5 // pred_check
        %p148 = pneg %p147
      $region18: #{learnable_matrix.1} parent=5 // pred_check_branch
        %150 = sbr.rel (%p148) target = $region20
      $region19: #{learnable_matrix.1} parent=5 // pred_region
        // Predicated region
        $region21: #{learnable_matrix.1} parent=19 // pred_check
          %p151 = pneg %p67
        $region22: #{learnable_matrix.1} parent=19 // pred_check_branch
          %153 = sbr.rel (%p151) target = $region24
        $region23: #{learnable_matrix.1} parent=19 // pred_region
          %s154 = sand.u32 %s57, 1
          %s155 = scalar_lea.sflag [#allocation3], %s154
          %s156 = sand.u32 %s57, 1
          %s157 = smul.addr %s156, 512
          %s158 = scalar_lea.vmem [#allocation2], %s157
          %s159 = smul.u32 32, %s20
          %161 = vsyncadd %s155, 0
          %s162 = smul.addr %s159, 2
          %s163 = smul.addr %s19, 64
          %s164 = sadd.s32 %s162, %s163
          %s165 = smul.addr %s164, 8
          %s166 = scalar_lea.hbm %s1, %s165
          %s167 = sshll.u32 %s166, 4
          %s168 = int_to_ptr.hbm [resolvable:$true] %s167
          %s169 = sshll.u32 %s158, 4
          %s170 = int_to_ptr.vmem [resolvable:$true] %s169
          %175 = dma.hbm_to_vmem [thread:$0]  %s168, 8192, %s170, %s155, 256, 256, 16
        $region24: #{learnable_matrix.1} parent=19 // pred_fallthru
          _
        // Predicated region
        $region25: #{learnable_matrix.1} parent=19 // pred_check
          %p176 = pneg %p95
        $region26: #{learnable_matrix.1} parent=19 // pred_check_branch
          %178 = sbr.rel (%p176) target = $region28
        $region27: #{learnable_matrix.1} parent=19 // pred_region
          %s179 = sadd.s32 %s19, %s20
          %s180 = smul.u32 2, %s179
          %p181 = scmp.lt.s32.totalorder %s180, 7
          %s182 = scalar_select %p181, %s180, 7
          %s183 = scalar_lea.vmem %s2, %s182
          %s184 = sadd.s32 %s19, %s20
          %s185 = smul.u32 2, %s184
        $region28: #{learnable_matrix.1} parent=19 // pred_fallthru
          _
      $region20: #{learnable_matrix.1} parent=5 // pred_fallthru
        _
      %p186 = scmp.le.s32.totalorder 1, %s12
      %p187 = scmp.lt.s32.totalorder %s12, 5
      %p188 = pnand %p186, %p187
      %p189 = pneg %p188
      // Predicated region
      $region29: #{learnable_matrix.1} parent=5 // pred_check
        _
      $region30: #{learnable_matrix.1} parent=5 // pred_check_branch
        %191 = sbr.rel (%p188) target = $region32
      $region31: #{learnable_matrix.1} parent=5 // pred_region
        %s192 = ssub.s32 %s12, 1
        %s193 = sand.u32 %s60, 1
        %s194 = scalar_lea.sflag [#allocation3], %s193
        %s195 = sand.u32 %s60, 1
        %s196 = smul.addr %s195, 512
        %s197 = scalar_lea.vmem [#allocation2], %s196
        // Predicated region
        $region33: #{learnable_matrix.1} parent=31 // pred_check
          %p198 = pneg %p73
        $region34: #{learnable_matrix.1} parent=31 // pred_check_branch
          %200 = sbr.rel (%p198) target = $region36
        $region35: #{learnable_matrix.1} parent=31 // pred_region
          %202 = dma.done %s194, 8192
        $region36: #{learnable_matrix.1} parent=31 // pred_fallthru
          _
        %p203 = pneg %p45
        %p204 = pneg %p42
        %s205 = sand.u32 %s60, 1
        %s206 = scalar_lea.sflag [#allocation3], %s205
        %s207 = sand.u32 %s60, 1
        %s208 = smul.addr %s207, 512
        %s209 = scalar_lea.vmem [#allocation2], %s208
        %p210 = pneg %p73
        %p211 = pneg %p70
        %s212 = sadd.s32 %s21, %s22
        %s213 = smul.u32 2, %s212
        %p214 = scmp.lt.s32.totalorder %s213, 7
        %s215 = scalar_select %p214, %s213, 7
        %s216 = scalar_lea.vmem %s2, %s215
        %p217 = pneg %p101
        %p218 = pneg %p98
        %p219 = pneg %p129
        %p220 = pneg %p126
        %s221 = sadd.s32 %s21, %s22
        %s222 = smul.u32 2, %s221
        %p223 = scmp.lt.s32.totalorder %s222, 7
        %s224 = scalar_select %p223, %s222, 7
        %s225 = smul.addr %s224, 8
        %s226 = scalar_lea.vmem %s3, %s225
        %s227 = smul.u32 32, %s22
        %s228 = sadd.s32 %s21, %s22
        %s229 = smul.u32 2, %s228
        %p230 = scmp.lt.s32.totalorder %s229, 7
        %s231 = scalar_select %p230, %s229, 7
        %s232 = scalar_lea.vmem %s2, %s231
        %s233 = sadd.s32 %s21, %s22
        %s234 = smul.u32 2, %s233
        %s235 = sadd.s32 %s21, %s22
        %s236 = smul.u32 2, %s235
        %p237 = scmp.lt.s32.totalorder %s236, 7
        %s238 = scalar_select %p237, %s236, 7
        %s239 = smul.addr %s238, 8
        %s240 = scalar_lea.vmem %s3, %s239
        %s241 = sadd.s32 %s21, %s22
        %s242 = smul.u32 2, %s241
        %v243 = vld [vmem:[%s0] sm:$0xff]
        %v244 = vld [vmem:[%s0 + $0x8] sm:$0xff]
        %v245 = vld [vmem:[%s197] sm:$0xff]
        %v246 = vld [vmem:[%s197 + $0x8] sm:$0xff]
        %v247 = vld [vmem:[%s197 + $0x10] sm:$0xff]
        %v248 = vld [vmem:[%s197 + $0x18] sm:$0xff]
        %v249 = vld [vmem:[%s197 + $0x20] sm:$0xff]
        %v250 = vld [vmem:[%s197 + $0x28] sm:$0xff]
        %v251 = vld [vmem:[%s197 + $0x30] sm:$0xff]
        %v252 = vld [vmem:[%s197 + $0x38] sm:$0xff]
        %v253 = vld [vmem:[%s197 + $0x40] sm:$0xff]
        %v254 = vld [vmem:[%s197 + $0x48] sm:$0xff]
        %v255 = vld [vmem:[%s197 + $0x50] sm:$0xff]
        %v256 = vld [vmem:[%s197 + $0x58] sm:$0xff]
        %v257 = vld [vmem:[%s197 + $0x60] sm:$0xff]
        %v258 = vld [vmem:[%s197 + $0x68] sm:$0xff]
        %v259 = vld [vmem:[%s197 + $0x70] sm:$0xff]
        %v260 = vld [vmem:[%s197 + $0x78] sm:$0xff]
        %v261 = vld [vmem:[%s197 + $0x80] sm:$0xff]
        %v262 = vld [vmem:[%s197 + $0x88] sm:$0xff]
        %v263 = vld [vmem:[%s197 + $0x90] sm:$0xff]
        %v264 = vld [vmem:[%s197 + $0x98] sm:$0xff]
        %v265 = vld [vmem:[%s197 + $0xa0] sm:$0xff]
        %v266 = vld [vmem:[%s197 + $0xa8] sm:$0xff]
        %v267 = vld [vmem:[%s197 + $0xb0] sm:$0xff]
        %v268 = vld [vmem:[%s197 + $0xb8] sm:$0xff]
        %v269 = vld [vmem:[%s197 + $0xc0] sm:$0xff]
        %v270 = vld [vmem:[%s197 + $0xc8] sm:$0xff]
        %v271 = vld [vmem:[%s197 + $0xd0] sm:$0xff]
        %v272 = vld [vmem:[%s197 + $0xd8] sm:$0xff]
        %v273 = vld [vmem:[%s197 + $0xe0] sm:$0xff]
        %v274 = vld [vmem:[%s197 + $0xe8] sm:$0xff]
        %v275 = vld [vmem:[%s197 + $0xf0] sm:$0xff]
        %v276 = vld [vmem:[%s197 + $0xf8] sm:$0xff]
        %v277 = vld [vmem:[%s197 + $0x100] sm:$0xff]
        %v278 = vld [vmem:[%s197 + $0x108] sm:$0xff]
        %v279 = vld [vmem:[%s197 + $0x110] sm:$0xff]
        %v280 = vld [vmem:[%s197 + $0x118] sm:$0xff]
        %v281 = vld [vmem:[%s197 + $0x120] sm:$0xff]
        %v282 = vld [vmem:[%s197 + $0x128] sm:$0xff]
        %v283 = vld [vmem:[%s197 + $0x130] sm:$0xff]
        %v284 = vld [vmem:[%s197 + $0x138] sm:$0xff]
        %v285 = vld [vmem:[%s197 + $0x140] sm:$0xff]
        %v286 = vld [vmem:[%s197 + $0x148] sm:$0xff]
        %v287 = vld [vmem:[%s197 + $0x150] sm:$0xff]
        %v288 = vld [vmem:[%s197 + $0x158] sm:$0xff]
        %v289 = vld [vmem:[%s197 + $0x160] sm:$0xff]
        %v290 = vld [vmem:[%s197 + $0x168] sm:$0xff]
        %v291 = vld [vmem:[%s197 + $0x170] sm:$0xff]
        %v292 = vld [vmem:[%s197 + $0x178] sm:$0xff]
        %v293 = vld [vmem:[%s197 + $0x180] sm:$0xff]
        %v294 = vld [vmem:[%s197 + $0x188] sm:$0xff]
        %v295 = vld [vmem:[%s197 + $0x190] sm:$0xff]
        %v296 = vld [vmem:[%s197 + $0x198] sm:$0xff]
        %v297 = vld [vmem:[%s197 + $0x1a0] sm:$0xff]
        %v298 = vld [vmem:[%s197 + $0x1a8] sm:$0xff]
        %v299 = vld [vmem:[%s197 + $0x1b0] sm:$0xff]
        %v300 = vld [vmem:[%s197 + $0x1b8] sm:$0xff]
        %v301 = vld [vmem:[%s197 + $0x1c0] sm:$0xff]
        %v302 = vld [vmem:[%s197 + $0x1c8] sm:$0xff]
        %v303 = vld [vmem:[%s197 + $0x1d0] sm:$0xff]
        %v304 = vld [vmem:[%s197 + $0x1d8] sm:$0xff]
        %v305 = vld [vmem:[%s197 + $0x1e0] sm:$0xff]
        %v306 = vld [vmem:[%s197 + $0x1e8] sm:$0xff]
        %v307 = vld [vmem:[%s197 + $0x1f0] sm:$0xff]
        %v308 = vld [vmem:[%s197 + $0x1f8] sm:$0xff]
        %v309 = vld [vmem:[%s232] sm:$0x3]
        %v311 = vperm.slane %v309, 0
        %v312 = vperm.slane %v309, 1
        %315 = vmatpush.xpose.msra.mxu0 %v275
        %316 = vmatpush.xpose.msra.mxu0 %v273
        %317 = vmatpush.xpose.msra.mxu0 %v271
        %318 = vmatpush.xpose.msra.mxu0 %v269
        %319 = vmatpush.xpose.msra.mxu0 %v267
        %320 = vmatpush.xpose.msra.mxu0 %v265
        %321 = vmatpush.xpose.msra.mxu0 %v263
        %322 = vmatpush.xpose.msra.mxu0 %v261
        %323 = vmatpush.xpose.msra.mxu0 %v259
        %324 = vmatpush.xpose.msra.mxu0 %v257
        %325 = vmatpush.xpose.msra.mxu0 %v255
        %326 = vmatpush.xpose.msra.mxu0 %v253
        %327 = vmatpush.xpose.msra.mxu0 %v251
        %328 = vmatpush.xpose.msra.mxu0 %v249
        %329 = vmatpush.xpose.msra.mxu0 %v247
        %330 = vmatpush.xpose.msra.mxu0 %v245
        %331 = vmatmul.f32.gmra.mxu0 %v243
        %v332 = vpop.f32.mrf.mxu0
        %v333 = vadd.f32 %v311, %v332
        %334 = vdwg.mxu0
        %335 = vmatpush.xpose.msra.mxu0 %v276
        %336 = vmatpush.xpose.msra.mxu0 %v274
        %337 = vmatpush.xpose.msra.mxu0 %v272
        %338 = vmatpush.xpose.msra.mxu0 %v270
        %339 = vmatpush.xpose.msra.mxu0 %v268
        %340 = vmatpush.xpose.msra.mxu0 %v266
        %341 = vmatpush.xpose.msra.mxu0 %v264
        %342 = vmatpush.xpose.msra.mxu0 %v262
        %343 = vmatpush.xpose.msra.mxu0 %v260
        %344 = vmatpush.xpose.msra.mxu0 %v258
        %345 = vmatpush.xpose.msra.mxu0 %v256
        %346 = vmatpush.xpose.msra.mxu0 %v254
        %347 = vmatpush.xpose.msra.mxu0 %v252
        %348 = vmatpush.xpose.msra.mxu0 %v250
        %349 = vmatpush.xpose.msra.mxu0 %v248
        %350 = vmatpush.xpose.msra.mxu0 %v246
        %351 = vmatmul.f32.gmra.mxu0 %v244
        %v352 = vpop.f32.mrf.mxu0
        %v353 = vadd.f32 %v333, %v352
        %354 = vdwg.mxu0
        %355 = vmatpush.xpose.msra.mxu0 %v307
        %356 = vmatpush.xpose.msra.mxu0 %v305
        %357 = vmatpush.xpose.msra.mxu0 %v303
        %358 = vmatpush.xpose.msra.mxu0 %v301
        %359 = vmatpush.xpose.msra.mxu0 %v299
        %360 = vmatpush.xpose.msra.mxu0 %v297
        %361 = vmatpush.xpose.msra.mxu0 %v295
        %362 = vmatpush.xpose.msra.mxu0 %v293
        %363 = vmatpush.xpose.msra.mxu0 %v291
        %364 = vmatpush.xpose.msra.mxu0 %v289
        %365 = vmatpush.xpose.msra.mxu0 %v287
        %366 = vmatpush.xpose.msra.mxu0 %v285
        %367 = vmatpush.xpose.msra.mxu0 %v283
        %368 = vmatpush.xpose.msra.mxu0 %v281
        %369 = vmatpush.xpose.msra.mxu0 %v279
        %370 = vmatpush.xpose.msra.mxu0 %v277
        %371 = vmatmul.f32.gmra.mxu0 %v243
        %v372 = vpop.f32.mrf.mxu0
        %v373 = vadd.f32 %v312, %v372
        %374 = vdwg.mxu0
        %375 = vmatpush.xpose.msra.mxu0 %v308
        %376 = vmatpush.xpose.msra.mxu0 %v306
        %377 = vmatpush.xpose.msra.mxu0 %v304
        %378 = vmatpush.xpose.msra.mxu0 %v302
        %379 = vmatpush.xpose.msra.mxu0 %v300
        %380 = vmatpush.xpose.msra.mxu0 %v298
        %381 = vmatpush.xpose.msra.mxu0 %v296
        %382 = vmatpush.xpose.msra.mxu0 %v294
        %383 = vmatpush.xpose.msra.mxu0 %v292
        %384 = vmatpush.xpose.msra.mxu0 %v290
        %385 = vmatpush.xpose.msra.mxu0 %v288
        %386 = vmatpush.xpose.msra.mxu0 %v286
        %387 = vmatpush.xpose.msra.mxu0 %v284
        %388 = vmatpush.xpose.msra.mxu0 %v282
        %389 = vmatpush.xpose.msra.mxu0 %v280
        %390 = vmatpush.xpose.msra.mxu0 %v278
        %391 = vmatmul.f32.gmra.mxu0 %v244
        %v392 = vpop.f32.mrf.mxu0
        %v393 = vadd.f32 %v373, %v392
        %394 = vdwg.mxu0
        %395 = vst [vmem:[%s240] sm:$0xff] %v353
        %396 = vst [vmem:[%s240 + $0x8] sm:$0xff] %v393
        %s397 = sadd.s32 %s21, %s22
        %s398 = smul.u32 2, %s397
        %p399 = scmp.lt.s32.totalorder %s398, 7
        %s400 = scalar_select %p399, %s398, 7
        %s401 = smul.addr %s400, 8
        %s402 = scalar_lea.vmem %s3, %s401
        // Predicated region
        $region37: #{learnable_matrix.1} parent=31 // pred_check
          %p403 = pneg %p126
        $region38: #{learnable_matrix.1} parent=31 // pred_check_branch
          %405 = sbr.rel (%p403) target = $region40
        $region39: #{learnable_matrix.1} parent=31 // pred_region
          %s406 = sadd.s32 %s21, %s22
          %s407 = smul.u32 2, %s406
        $region40: #{learnable_matrix.1} parent=31 // pred_fallthru
          _
      $region32: #{learnable_matrix.1} parent=5 // pred_fallthru
        _
      %p408 = scmp.le.s32.totalorder 2, %s12
      // Predicated region
      $region41: #{learnable_matrix.1} parent=5 // pred_check
        %p409 = pneg %p408
      $region42: #{learnable_matrix.1} parent=5 // pred_check_branch
        %411 = sbr.rel (%p409) target = $region44
      $region43: #{learnable_matrix.1} parent=5 // pred_region
        %s412 = ssub.s32 %s12, 2
        // Predicated region
        $region45: #{learnable_matrix.1} parent=43 // pred_check
          %p413 = pneg %p132
        $region46: #{learnable_matrix.1} parent=43 // pred_check_branch
          %415 = sbr.rel (%p413) target = $region48
        $region47: #{learnable_matrix.1} parent=43 // pred_region
          %s416 = sadd.s32 %s23, %s24
          %s417 = smul.u32 2, %s416
          %p418 = scmp.lt.s32.totalorder %s417, 7
          %s419 = scalar_select %p418, %s417, 7
          %s420 = smul.addr %s419, 8
          %s421 = scalar_lea.vmem %s3, %s420
        $region48: #{learnable_matrix.1} parent=43 // pred_fallthru
          _
      $region44: #{learnable_matrix.1} parent=5 // pred_fallthru
        _
    $region6: #{learnable_matrix.1} parent=1 // loop_footer
      %s16 = sadd.s32 1, %s12
    $region7: #{learnable_matrix.1} parent=1 // loop_footer_branch
      %11 = sbr.rel target = $region3
    $region8: #{learnable_matrix.1} parent=1 // loop_exit
      _
    %422 = vsyncpa [#allocation3], 1
    %s423 = scalar_lea.sflag [#allocation3], 1
    %424 = vsyncpa %s423, 1

</llo_original>
